<compile_context>
chip_gen: v6e
topology: v6e:2x2x1
jax: 0.10.0
libtpu: 0.0.40
codegen_flags: <defaults>
</compile_context>

<pallas_src>
import numpy as np
import jax
import jax.numpy as jnp
from jax.experimental import pallas as pl
from jax.experimental.pallas import tpu as pltpu


def _bilinear_matrix(out_size: int, in_size: int) -> np.ndarray:
    """1-D interpolation matrix replicating torch.nn.functional.interpolate
    (mode='bilinear', align_corners=False) sampling/clamping rules.
    Every row sums to 1 (needed for folding the normalization into an output affine)."""
    scale = in_size / out_size
    dst = np.arange(out_size, dtype=np.float64)
    src = scale * (dst + 0.5) - 0.5
    src = np.maximum(src, 0.0)                      # PyTorch clamps negative source index to 0
    i0 = np.minimum(np.floor(src).astype(np.int64), in_size - 1)
    i1 = np.minimum(i0 + 1, in_size - 1)
    w1 = (src - i0).astype(np.float32)
    w0 = 1.0 - w1
    mat = np.zeros((out_size, in_size), dtype=np.float32)
    mat[np.arange(out_size), i0] += w0
    mat[np.arange(out_size), i1] += w1
    return mat


def _norm_resize_kernel(scale_ref, bias_ref, x_ref, a_ref, bt_ref, o_ref):
    # scale_ref / bias_ref : SMEM scalar-prefetch, shape (C,) f32  (1/std, -mean/std)
    # x_ref  : VMEM (T, H_in, W_in)    -- all T frames of one (batch, channel)
    # a_ref  : VMEM (H_out, H_in)      -- row interpolation matrix
    # bt_ref : VMEM (W_in, W_out)      -- column interpolation matrix (pre-transposed)
    # o_ref  : VMEM (T, H_out, W_out)  -- written directly into the (B,C,T,Ho,Wo) output
    c = pl.program_id(1)
    scale = scale_ref[c]
    bias = bias_ref[c]
    a = a_ref[...]
    bt = bt_ref[...]
    n_frames = x_ref.shape[0]
    for t in range(n_frames):                        # static unroll over the T frames in-block
        # W-resize first so both matmul outputs (and the stored block) are lane-dense in W_out.
        tmp = jnp.dot(x_ref[t], bt, preferred_element_type=jnp.float32)   # (H_in, W_out)  MXU
        tmp = tmp.astype(a.dtype)                    # keep bf16 MXU rate when io_dtype=bf16
        res = jnp.dot(a, tmp, preferred_element_type=jnp.float32)         # (H_out, W_out) MXU
        # Folded pixel normalization (rows of A and Bt sum to 1):
        #   A @ ((x - mean)/std) @ Bt == (A @ x @ Bt) * (1/std) - mean/std
        o_ref[t] = (res * scale + bias).astype(o_ref.dtype)


def card_model_preprocess(videos, pixel_mean, pixel_std, out_size,
                          io_dtype=jnp.float32, out_dtype=jnp.float32):
    """Fused normalize -> bilinear resize -> rearrange to 'b c T h w' (Pallas)."""
    B, T, C, H, W = videos.shape
    Ho = Wo = int(out_size)

    # Frame-major flatten, identical to torch's videos.flatten(0, 1): (B*T, C, H, W).
    x = videos.reshape(B * T, C, H, W).astype(io_dtype)
    a = jnp.asarray(_bilinear_matrix(Ho, H)).astype(io_dtype)        # (Ho, H)
    bt = jnp.asarray(_bilinear_matrix(Wo, W).T).astype(io_dtype)     # (W, Wo)

    mean = np.asarray(pixel_mean, np.float32)
    std = np.asarray(pixel_std, np.float32)
    scale = jnp.asarray(1.0 / std, jnp.float32)                       # (C,) -> SMEM
    bias = jnp.asarray(-mean / std, jnp.float32)                      # (C,) -> SMEM

    itm_io = jnp.dtype(io_dtype).itemsize
    itm_out = jnp.dtype(out_dtype).itemsize

    # Cost hint for XLA's scheduler around the custom call.
    n_imgs = B * T * C
    flops = 2 * n_imgs * (H * W * Wo + Ho * H * Wo)
    bytes_accessed = (n_imgs * H * W * itm_io
                      + n_imgs * Ho * Wo * itm_out
                      + (Ho * H + W * Wo) * itm_io)

    # Scoped-VMEM budget sized from the real double-buffered block footprint, so
    # production-sized blocks (e.g. T=8, 448x448 f32) don't hit the default limit.
    # Capped at 64 MiB (v7x physical VMEM per TensorCore).
    block_bytes = (2 * T * H * W * itm_io            # input block, double-buffered
                   + 2 * T * Ho * Wo * itm_out       # output block, double-buffered
                   + 2 * (Ho * H + W * Wo) * itm_io  # resize matrices, double-buffered
                   + 2 * (H * Wo + Ho * Wo) * 4)     # in-flight f32 intermediates (margin)
    vmem_limit = int(min(max(32 << 20, (block_bytes * 5) // 4), 64 << 20))

    out = pl.pallas_call(
        _norm_resize_kernel,
        out_shape=jax.ShapeDtypeStruct((B, C, T, Ho, Wo), out_dtype),
        grid_spec=pltpu.PrefetchScalarGridSpec(
            num_scalar_prefetch=2,                   # scale, bias -> SMEM
            grid=(B, C),
            in_specs=[
                # (T, 1, H, W) strided block = all T frames of (batch b, channel c);
                # the size-1 channel dim is squeezed out of the kernel ref.
                pl.BlockSpec((T, None, H, W), lambda b, c, scale, bias: (b, c, 0, 0)),
                # Interpolation matrices: constant block index -> DMA'd once, stay resident.
                pl.BlockSpec((Ho, H), lambda b, c, scale, bias: (0, 0)),
                pl.BlockSpec((W, Wo), lambda b, c, scale, bias: (0, 0)),
            ],
            # Rearrange fused into the output spec: block (1,1,T,Ho,Wo) at (b,c,0,0,0)
            # writes straight into the 'b c T h w' layout (no post-hoc transpose).
            out_specs=pl.BlockSpec((None, None, T, Ho, Wo),
                                   lambda b, c, scale, bias: (b, c, 0, 0, 0)),
        ),
        compiler_params=pltpu.CompilerParams(
            dimension_semantics=("parallel", "parallel"),   # independent steps -> megacore
            vmem_limit_bytes=vmem_limit,
        ),
        cost_estimate=pl.CostEstimate(
            flops=flops, transcendentals=0, bytes_accessed=bytes_accessed),
    )(scale, bias, x, a, bt)
    return out


def card_model_forward(videos, pixel_mean, pixel_std, out_size,
                       io_dtype=jnp.float32, out_dtype=jnp.float32):
    vid_1 = card_model_preprocess(videos, pixel_mean, pixel_std, out_size,
                                  io_dtype=io_dtype, out_dtype=out_dtype)
    # TODO(synk): video_backbone / fusion_encoder / decoder / compute_loss come from external
    # registries (BACKBONE_REGISTRY / META_ARCH_REGISTRY) and cannot be derived from this module.
    return vid_1


if __name__ == "__main__":
    key = jax.random.PRNGKey(0)

    # Small shapes consistent with the module: B=2 videos, T=4 frames, C=3 RGB channels,
    # 16x16 spatial, deterministic resize target (stand-in for the host-side
    # np.random.choice([256,288,320,352,384,416,448]) at production resolution).
    B, T, C, H, W = 2, 4, 3, 16, 16
    out_size = 24

    videos = jax.random.uniform(key, (B, T, C, H, W), dtype=jnp.float32)
    pixel_mean = [0.485, 0.456, 0.406]
    pixel_std = [0.229, 0.224, 0.225]

    # f32 path
    vid_1 = card_model_forward(videos, pixel_mean, pixel_std, out_size)
    vid_1 = jax.block_until_ready(vid_1)
    assert vid_1.shape == (B, C, T, out_size, out_size)

    # Pure-JAX reference of the same math (normalize + separable bilinear resize + rearrange).
    mean = jnp.asarray(pixel_mean, jnp.float32).reshape(1, 1, C, 1, 1)
    std = jnp.asarray(pixel_std, jnp.float32).reshape(1, 1, C, 1, 1)
    normed = (videos - mean) / std
    a_ref_mat = jnp.asarray(_bilinear_matrix(out_size, H))
    b_ref_mat = jnp.asarray(_bilinear_matrix(out_size, W))
    ref = jnp.einsum('oh,btchw,pw->btcop', a_ref_mat, normed, b_ref_mat)
    ref = jnp.transpose(ref, (0, 2, 1, 3, 4))
    np.testing.assert_allclose(np.asarray(vid_1), np.asarray(ref), rtol=1e-5, atol=1e-5)

    # bf16 I/O path (bandwidth optimization for v6e/v7x) -- loose tolerance sanity check.
    vid_bf16 = card_model_forward(videos, pixel_mean, pixel_std, out_size,
                                  io_dtype=jnp.bfloat16, out_dtype=jnp.bfloat16)
    vid_bf16 = jax.block_until_ready(vid_bf16)
    assert vid_bf16.shape == (B, C, T, out_size, out_size)
    np.testing.assert_allclose(np.asarray(vid_bf16, dtype=np.float32), np.asarray(ref),
                               rtol=5e-2, atol=5e-2)

    print("KERNEL_OK")
</pallas_src>

<mosaic_0001>
module attributes {stable_mosaic.version = 11 : i64} {
  func.func @_norm_resize_kernel(%arg0: i32, %arg1: i32, %arg2: memref<3xf32, #tpu.memory_space<smem>>, %arg3: memref<3xf32, #tpu.memory_space<smem>>, %arg4: memref<4x1x16x16xf32, #tpu.memory_space<vmem>>, %arg5: memref<24x16xf32, #tpu.memory_space<vmem>>, %arg6: memref<16x24xf32, #tpu.memory_space<vmem>>, %arg7: memref<1x1x4x24x24xf32, #tpu.memory_space<vmem>>) attributes {dimension_semantics = [#tpu.dimension_semantics<parallel>, #tpu.dimension_semantics<parallel>], iteration_bounds = array<i64: 2, 3>, scalar_prefetch = 2 : i64, scratch_operands = 0 : i64, tpu.core_type = #tpu.core_type<tc>, window_params = [{transform_indices = @transform_0, window_bounds = array<i64: 4, 1, 16, 16>}, {pipeline_mode = #tpu.pipeline_mode<synchronous>, transform_indices = @transform_1, window_bounds = array<i64: 24, 16>}, {pipeline_mode = #tpu.pipeline_mode<synchronous>, transform_indices = @transform_2, window_bounds = array<i64: 16, 24>}, {transform_indices = @transform_3, window_bounds = array<i64: 1, 1, 4, 24, 24>}]} {
    %0 = arith.index_cast %arg1 : i32 to index
    %1 = memref.load %arg2[%0] : memref<3xf32, #tpu.memory_space<smem>>
    %2 = arith.index_cast %arg1 : i32 to index
    %3 = memref.load %arg3[%2] : memref<3xf32, #tpu.memory_space<smem>>
    %c0 = arith.constant 0 : index
    %c0_0 = arith.constant 0 : index
    %4 = vector.load %arg5[%c0, %c0_0] : memref<24x16xf32, #tpu.memory_space<vmem>>, vector<24x16xf32>
    %c0_1 = arith.constant 0 : index
    %c0_2 = arith.constant 0 : index
    %5 = vector.load %arg6[%c0_1, %c0_2] : memref<16x24xf32, #tpu.memory_space<vmem>>, vector<16x24xf32>
    %c0_3 = arith.constant 0 : index
    %c0_4 = arith.constant 0 : index
    %c0_5 = arith.constant 0 : index
    %c0_6 = arith.constant 0 : index
    %6 = vector.load %arg4[%c0_3, %c0_4, %c0_5, %c0_6] : memref<4x1x16x16xf32, #tpu.memory_space<vmem>>, vector<1x1x16x16xf32>
    %7 = vector.shape_cast %6 : vector<1x1x16x16xf32> to vector<16x16xf32>
    %cst = arith.constant dense<0.000000e+00> : vector<16x24xf32>
    %8 = tpu.matmul %7, %5, %cst {dimension_numbers = #tpu.dot_dimension_numbers<[1], [0], [0], [1], [0, 0, 1, 1], [], []>} : vector<16x16xf32>, vector<16x24xf32>, vector<16x24xf32> -> vector<16x24xf32>
    %cst_7 = arith.constant dense<0.000000e+00> : vector<24x24xf32>
    %9 = tpu.matmul %4, %8, %cst_7 {dimension_numbers = #tpu.dot_dimension_numbers<[1], [0], [0], [1], [0, 0, 1, 1], [], []>} : vector<24x16xf32>, vector<16x24xf32>, vector<24x24xf32> -> vector<24x24xf32>
    %10 = vector.broadcast %1 : f32 to vector<24x24xf32>
    %11 = arith.mulf %9, %10 : vector<24x24xf32>
    %12 = vector.broadcast %3 : f32 to vector<24x24xf32>
    %13 = arith.addf %11, %12 : vector<24x24xf32>
    %c0_8 = arith.constant 0 : index
    %c0_9 = arith.constant 0 : index
    %c0_10 = arith.constant 0 : index
    %c0_11 = arith.constant 0 : index
    %c0_12 = arith.constant 0 : index
    %14 = vector.load %arg7[%c0_8, %c0_9, %c0_10, %c0_11, %c0_12] : memref<1x1x4x24x24xf32, #tpu.memory_space<vmem>>, vector<1x1x1x24x24xf32>
    %15 = vector.shape_cast %14 : vector<1x1x1x24x24xf32> to vector<24x24xf32>
    %16 = vector.shape_cast %13 : vector<24x24xf32> to vector<1x1x1x24x24xf32>
    tpu.vector_store %arg7[%c0_8, %c0_9, %c0_10, %c0_11, %c0_12], %16 {strides = array<i32>} : memref<1x1x4x24x24xf32, #tpu.memory_space<vmem>>, vector<1x1x1x24x24xf32>,
    %c1 = arith.constant 1 : index
    %c0_13 = arith.constant 0 : index
    %c0_14 = arith.constant 0 : index
    %c0_15 = arith.constant 0 : index
    %17 = vector.load %arg4[%c1, %c0_13, %c0_14, %c0_15] : memref<4x1x16x16xf32, #tpu.memory_space<vmem>>, vector<1x1x16x16xf32>
    %18 = vector.shape_cast %17 : vector<1x1x16x16xf32> to vector<16x16xf32>
    %cst_16 = arith.constant dense<0.000000e+00> : vector<16x24xf32>
    %19 = tpu.matmul %18, %5, %cst_16 {dimension_numbers = #tpu.dot_dimension_numbers<[1], [0], [0], [1], [0, 0, 1, 1], [], []>} : vector<16x16xf32>, vector<16x24xf32>, vector<16x24xf32> -> vector<16x24xf32>
    %cst_17 = arith.constant dense<0.000000e+00> : vector<24x24xf32>
    %20 = tpu.matmul %4, %19, %cst_17 {dimension_numbers = #tpu.dot_dimension_numbers<[1], [0], [0], [1], [0, 0, 1, 1], [], []>} : vector<24x16xf32>, vector<16x24xf32>, vector<24x24xf32> -> vector<24x24xf32>
    %21 = vector.broadcast %1 : f32 to vector<24x24xf32>
    %22 = arith.mulf %20, %21 : vector<24x24xf32>
    %23 = vector.broadcast %3 : f32 to vector<24x24xf32>
    %24 = arith.addf %22, %23 : vector<24x24xf32>
    %c0_18 = arith.constant 0 : index
    %c0_19 = arith.constant 0 : index
    %c1_20 = arith.constant 1 : index
    %c0_21 = arith.constant 0 : index
    %c0_22 = arith.constant 0 : index
    %25 = vector.load %arg7[%c0_18, %c0_19, %c1_20, %c0_21, %c0_22] : memref<1x1x4x24x24xf32, #tpu.memory_space<vmem>>, vector<1x1x1x24x24xf32>
    %26 = vector.shape_cast %25 : vector<1x1x1x24x24xf32> to vector<24x24xf32>
    %27 = vector.shape_cast %24 : vector<24x24xf32> to vector<1x1x1x24x24xf32>
    tpu.vector_store %arg7[%c0_18, %c0_19, %c1_20, %c0_21, %c0_22], %27 {strides = array<i32>} : memref<1x1x4x24x24xf32, #tpu.memory_space<vmem>>, vector<1x1x1x24x24xf32>,
    %c2 = arith.constant 2 : index
    %c0_23 = arith.constant 0 : index
    %c0_24 = arith.constant 0 : index
    %c0_25 = arith.constant 0 : index
    %28 = vector.load %arg4[%c2, %c0_23, %c0_24, %c0_25] : memref<4x1x16x16xf32, #tpu.memory_space<vmem>>, vector<1x1x16x16xf32>
    %29 = vector.shape_cast %28 : vector<1x1x16x16xf32> to vector<16x16xf32>
    %cst_26 = arith.constant dense<0.000000e+00> : vector<16x24xf32>
    %30 = tpu.matmul %29, %5, %cst_26 {dimension_numbers = #tpu.dot_dimension_numbers<[1], [0], [0], [1], [0, 0, 1, 1], [], []>} : vector<16x16xf32>, vector<16x24xf32>, vector<16x24xf32> -> vector<16x24xf32>
    %cst_27 = arith.constant dense<0.000000e+00> : vector<24x24xf32>
    %31 = tpu.matmul %4, %30, %cst_27 {dimension_numbers = #tpu.dot_dimension_numbers<[1], [0], [0], [1], [0, 0, 1, 1], [], []>} : vector<24x16xf32>, vector<16x24xf32>, vector<24x24xf32> -> vector<24x24xf32>
    %32 = vector.broadcast %1 : f32 to vector<24x24xf32>
    %33 = arith.mulf %31, %32 : vector<24x24xf32>
    %34 = vector.broadcast %3 : f32 to vector<24x24xf32>
    %35 = arith.addf %33, %34 : vector<24x24xf32>
    %c0_28 = arith.constant 0 : index
    %c0_29 = arith.constant 0 : index
    %c2_30 = arith.constant 2 : index
    %c0_31 = arith.constant 0 : index
    %c0_32 = arith.constant 0 : index
    %36 = vector.load %arg7[%c0_28, %c0_29, %c2_30, %c0_31, %c0_32] : memref<1x1x4x24x24xf32, #tpu.memory_space<vmem>>, vector<1x1x1x24x24xf32>
    %37 = vector.shape_cast %36 : vector<1x1x1x24x24xf32> to vector<24x24xf32>
    %38 = vector.shape_cast %35 : vector<24x24xf32> to vector<1x1x1x24x24xf32>
    tpu.vector_store %arg7[%c0_28, %c0_29, %c2_30, %c0_31, %c0_32], %38 {strides = array<i32>} : memref<1x1x4x24x24xf32, #tpu.memory_space<vmem>>, vector<1x1x1x24x24xf32>,
    %c3 = arith.constant 3 : index
    %c0_33 = arith.constant 0 : index
    %c0_34 = arith.constant 0 : index
    %c0_35 = arith.constant 0 : index
    %39 = vector.load %arg4[%c3, %c0_33, %c0_34, %c0_35] : memref<4x1x16x16xf32, #tpu.memory_space<vmem>>, vector<1x1x16x16xf32>
    %40 = vector.shape_cast %39 : vector<1x1x16x16xf32> to vector<16x16xf32>
    %cst_36 = arith.constant dense<0.000000e+00> : vector<16x24xf32>
    %41 = tpu.matmul %40, %5, %cst_36 {dimension_numbers = #tpu.dot_dimension_numbers<[1], [0], [0], [1], [0, 0, 1, 1], [], []>} : vector<16x16xf32>, vector<16x24xf32>, vector<16x24xf32> -> vector<16x24xf32>
    %cst_37 = arith.constant dense<0.000000e+00> : vector<24x24xf32>
    %42 = tpu.matmul %4, %41, %cst_37 {dimension_numbers = #tpu.dot_dimension_numbers<[1], [0], [0], [1], [0, 0, 1, 1], [], []>} : vector<24x16xf32>, vector<16x24xf32>, vector<24x24xf32> -> vector<24x24xf32>
    %43 = vector.broadcast %1 : f32 to vector<24x24xf32>
    %44 = arith.mulf %42, %43 : vector<24x24xf32>
    %45 = vector.broadcast %3 : f32 to vector<24x24xf32>
    %46 = arith.addf %44, %45 : vector<24x24xf32>
    %c0_38 = arith.constant 0 : index
    %c0_39 = arith.constant 0 : index
    %c3_40 = arith.constant 3 : index
    %c0_41 = arith.constant 0 : index
    %c0_42 = arith.constant 0 : index
    %47 = vector.load %arg7[%c0_38, %c0_39, %c3_40, %c0_41, %c0_42] : memref<1x1x4x24x24xf32, #tpu.memory_space<vmem>>, vector<1x1x1x24x24xf32>
    %48 = vector.shape_cast %47 : vector<1x1x1x24x24xf32> to vector<24x24xf32>
    %49 = vector.shape_cast %46 : vector<24x24xf32> to vector<1x1x1x24x24xf32>
    tpu.vector_store %arg7[%c0_38, %c0_39, %c3_40, %c0_41, %c0_42], %49 {strides = array<i32>} : memref<1x1x4x24x24xf32, #tpu.memory_space<vmem>>, vector<1x1x1x24x24xf32>,
    return
  }
  func.func @transform_0(%arg0: i32, %arg1: i32, %arg2: memref<3xf32, #tpu.memory_space<smem>>, %arg3: memref<3xf32, #tpu.memory_space<smem>>) -> (i32, i32, i32, i32) {
    %c0_i32 = arith.constant 0 : i32
    %c0_i32_0 = arith.constant 0 : i32
    %c0_i32_1 = arith.constant 0 : i32
    return %arg0, %arg1, %c0_i32, %c0_i32_0 : i32, i32, i32, i32
  }
  func.func @transform_1(%arg0: i32, %arg1: i32, %arg2: memref<3xf32, #tpu.memory_space<smem>>, %arg3: memref<3xf32, #tpu.memory_space<smem>>) -> (i32, i32) {
    %c0_i32 = arith.constant 0 : i32
    %c0_i32_0 = arith.constant 0 : i32
    %c0_i32_1 = arith.constant 0 : i32
    return %c0_i32, %c0_i32_0 : i32, i32
  }
  func.func @transform_2(%arg0: i32, %arg1: i32, %arg2: memref<3xf32, #tpu.memory_space<smem>>, %arg3: memref<3xf32, #tpu.memory_space<smem>>) -> (i32, i32) {
    %c0_i32 = arith.constant 0 : i32
    %c0_i32_0 = arith.constant 0 : i32
    %c0_i32_1 = arith.constant 0 : i32
    return %c0_i32, %c0_i32_0 : i32, i32
  }
  func.func @transform_3(%arg0: i32, %arg1: i32, %arg2: memref<3xf32, #tpu.memory_space<smem>>, %arg3: memref<3xf32, #tpu.memory_space<smem>>) -> (i32, i32, i32, i32, i32) {
    %c0_i32 = arith.constant 0 : i32
    %c0_i32_0 = arith.constant 0 : i32
    %c0_i32_1 = arith.constant 0 : i32
    %c0_i32_2 = arith.constant 0 : i32
    return %arg0, %arg1, %c0_i32, %c0_i32_0, %c0_i32_1 : i32, i32, i32, i32, i32
  }
}

</mosaic_0001>

<llo_original>
// kernel: tpu_custom_call.1
$region0: #{tpu_custom_call.1}
  #allocation0 [shape = 'u32[]', space=smem, size = 0x4, offset = 0x4, fixed_abs, tag = 'smem constant byte address 0x4 - core index']
  #allocation1 [shape = 'u32[144,128]{1,0:T(1,128)}', space=vmem, size = 0x12000, scoped, tag = 'internal scratch']
  #allocation2 [shape = 's32[1]{0}', space=sflag, size = 0x4, scoped, tag = 'scoped memory for tpu_custom_call.1']
  #allocation3 [shape = 'u8[512]{0}', space=smem, size = 0x200, scoped, tag = 'prefetched SMEM operand 0']
  #allocation4 [shape = 'u8[512]{0}', space=smem, size = 0x200, scoped, tag = 'prefetched SMEM operand 1']
  #allocation9 [shape = 's32[]', space=sflag, size = 0x4, offset = 0, fixed_abs, tag = 'sflag constant byte address 0x0 - dummy sync flag']
  %s0 = inlined_call_operand.vmem [shape: f32[3], index: 0, kind: input, shape index: {}]
  %s1 = inlined_call_operand.vmem [shape: f32[3], index: 1, kind: input, shape index: {}]
  %s2 = inlined_call_operand.hbm [shape: f32[8,3,16,16], index: 2, kind: input, shape index: {}]
  %s3 = inlined_call_operand.vmem [shape: f32[24,16], index: 3, kind: input, shape index: {}]
  %s4 = inlined_call_operand.vmem [shape: f32[16,24], index: 4, kind: input, shape index: {}]
  %s5 = inlined_call_operand.hbm [shape: f32[2,3,4,24,24], index: 5, kind: output, shape index: {}]
  %s6 = sld [smem:[#allocation0]]
  $region49: #{tpu_custom_call.1} parent=0
    _
  %s8 = ssub.s32 1, %s6
  %s9 = scalar_select 0, %s8, %s6
  %s10 = sshll.u32 %s0, 4
  %s11 = int_to_ptr.vmem [resolvable:$true] %s10
  %13 = dma.vmem_to_smem %s11, 16, [#allocation3], [#allocation2]
  %s14 = sshll.u32 %s1, 4
  %s15 = int_to_ptr.vmem [resolvable:$true] %s14
  %17 = dma.vmem_to_smem %s15, 16, [#allocation4], [#allocation2]
  %18 = dma.done [#allocation2], 32
  %19 = sfence
  $region1: #{tpu_custom_call.1} parent=0
    #allocation5 [shape = 'u8[65536]{0}', space=vmem, size = 0x10000, scoped, tag = 'input window, operand 2']
    #allocation6 [shape = 's32[2]{0}', space=sflag, size = 0x8, scoped, tag = 'scoped memory for tpu_custom_call.1']
    #allocation7 [shape = 's32[2]{0}', space=sflag, size = 0x8, scoped, tag = 'scoped memory for tpu_custom_call.1']
    #allocation8 [shape = 'u8[98304]{0}', space=vmem, size = 0x18000, scoped, tag = 'output window, operand 0']
    %20 = vsyncpa [#allocation6], 0
    %s21 = scalar_lea.sflag [#allocation6], 1
    %22 = vsyncpa %s21, 0
    %23 = vsyncpa [#allocation7], 0
    %s24 = scalar_lea.sflag [#allocation7], 1
    %25 = vsyncpa %s24, 0
    loop: start=0, step=1, limit=8
    $region2: #{tpu_custom_call.1} parent=1 // loop_pre_header
      _
    $region3: #{tpu_custom_call.1} parent=1 // loop_header
      %s27 = sphi 0, %s31
      %p28 = scmp.ge.s32.totalorder %s27, 8
      %s34 = sphi 0, %s46
      %s35 = sphi 0, %s42
      %s36 = sphi 0, %s34
      %s37 = sphi 0, %s35
      %s38 = sphi 0, %s36
      %s39 = sphi 0, %s37
      %s51 = sphi 0, %s53
      %s54 = sphi 0, %s51
      %s55 = sphi 0, %s54
      %s71 = sphi 0, %s55
      %s75 = sphi 0, %s75
      %s77 = sphi 0, %s75
      %s78 = sphi 0, %s77
      %s92 = sphi 0, %s78
      %s96 = sphi 0, %s96
      %s98 = sphi 0, %s96
      %s99 = sphi 0, %s98
      %s113 = sphi 0, %s99
      %s121 = sphi 0, %s123
      %s124 = sphi 0, %s121
      %s125 = sphi 0, %s124
      %s141 = sphi 0, %s125
    $region4: #{tpu_custom_call.1} parent=1 // loop_header_branch
      %30 = sbr.rel (%p28) target = $region8
    $region5: #{tpu_custom_call.1} parent=1 // loop_body
      %s32 = ssub.s32 %s27, 1
      %s33 = ssub.s32 %s27, 2
      %s40 = sadd.s32 1, %s35
      %p41 = scmp.ge.s32.totalorder %s40, 3
      %s42 = scalar_select %p41, 0, %s40
      %s43 = sadd.s32 1, %s34
      %s44 = scalar_select %p41, %s43, %s34
      %p45 = scmp.ge.s32.totalorder %s44, 2
      %s46 = scalar_select %p45, 0, %s44
      %s47 = ssub.s32 %s34, %s46
      %s48 = ssub.s32 %s35, %s42
      %s49 = sor.u32 %s47, %s48
      %p50 = scmp.eq.s32.totalorder %s49, 0
      %s52 = sadd.s32 %s51, 1
      %s53 = scalar_select %p50, %s51, %s52
      %p56 = pneg %p50
      %p57 = scmp.eq.s32.totalorder %s27, 5
      %p58 = por %p56, %p57
      %p59 = scmp.ne.s32.totalorder %s51, %s54
      %p60 = scmp.eq.s32.totalorder %s27, 0
      %p61 = por %p59, %p60
      %p62 = scmp.ne.s32.totalorder %s51, %s54
      %p63 = scmp.eq.s32.totalorder %s32, 5
      %p64 = por %p62, %p63
      %p65 = scmp.ne.s32.totalorder %s54, %s55
      %p66 = scmp.eq.s32.totalorder %s32, 0
      %p67 = por %p65, %p66
      %p68 = scmp.ne.s32.totalorder %s54, %s55
      %p69 = scmp.eq.s32.totalorder %s33, 5
      %p70 = por %p68, %p69
      %p72 = scmp.ne.s32.totalorder %s55, %s71
      %p73 = scmp.eq.s32.totalorder %s33, 0
      %p74 = por %p72, %p73
      %s76 = sadd.s32 %s75, 1
      %p79 = scmp.eq.s32.totalorder %s27, 5
      %p80 = scmp.ne.s32.totalorder %s75, %s77
      %p81 = scmp.eq.s32.totalorder %s27, 0
      %p82 = por %p80, %p81
      %p83 = scmp.ne.s32.totalorder %s75, %s77
      %p84 = scmp.eq.s32.totalorder %s32, 5
      %p85 = por %p83, %p84
      %p86 = scmp.ne.s32.totalorder %s77, %s78
      %p87 = scmp.eq.s32.totalorder %s32, 0
      %p88 = por %p86, %p87
      %p89 = scmp.ne.s32.totalorder %s77, %s78
      %p90 = scmp.eq.s32.totalorder %s33, 5
      %p91 = por %p89, %p90
      %p93 = scmp.ne.s32.totalorder %s78, %s92
      %p94 = scmp.eq.s32.totalorder %s33, 0
      %p95 = por %p93, %p94
      %s97 = sadd.s32 %s96, 1
      %p100 = scmp.eq.s32.totalorder %s27, 5
      %p101 = scmp.ne.s32.totalorder %s96, %s98
      %p102 = scmp.eq.s32.totalorder %s27, 0
      %p103 = por %p101, %p102
      %p104 = scmp.ne.s32.totalorder %s96, %s98
      %p105 = scmp.eq.s32.totalorder %s32, 5
      %p106 = por %p104, %p105
      %p107 = scmp.ne.s32.totalorder %s98, %s99
      %p108 = scmp.eq.s32.totalorder %s32, 0
      %p109 = por %p107, %p108
      %p110 = scmp.ne.s32.totalorder %s98, %s99
      %p111 = scmp.eq.s32.totalorder %s33, 5
      %p112 = por %p110, %p111
      %p114 = scmp.ne.s32.totalorder %s99, %s113
      %p115 = scmp.eq.s32.totalorder %s33, 0
      %p116 = por %p114, %p115
      %s117 = ssub.s32 %s34, %s46
      %s118 = ssub.s32 %s35, %s42
      %s119 = sor.u32 %s117, %s118
      %p120 = scmp.eq.s32.totalorder %s119, 0
      %s122 = sadd.s32 %s121, 1
      %s123 = scalar_select %p120, %s121, %s122
      %p126 = pneg %p120
      %p127 = scmp.eq.s32.totalorder %s27, 5
      %p128 = por %p126, %p127
      %p129 = scmp.ne.s32.totalorder %s121, %s124
      %p130 = scmp.eq.s32.totalorder %s27, 0
      %p131 = por %p129, %p130
      %p132 = scmp.ne.s32.totalorder %s121, %s124
      %p133 = scmp.eq.s32.totalorder %s32, 5
      %p134 = por %p132, %p133
      %p135 = scmp.ne.s32.totalorder %s124, %s125
      %p136 = scmp.eq.s32.totalorder %s32, 0
      %p137 = por %p135, %p136
      %p138 = scmp.ne.s32.totalorder %s124, %s125
      %p139 = scmp.eq.s32.totalorder %s33, 5
      %p140 = por %p138, %p139
      %p142 = scmp.ne.s32.totalorder %s125, %s141
      %p143 = scmp.eq.s32.totalorder %s33, 0
      %p144 = por %p142, %p143
      %p145 = scmp.le.s32.totalorder 1, %s27
      %p146 = scmp.lt.s32.totalorder %s27, 7
      %p147 = pnand %p145, %p146
      %p148 = pneg %p147
      // Predicated region
      $region9: #{tpu_custom_call.1} parent=5 // pred_check
        _
      $region10: #{tpu_custom_call.1} parent=5 // pred_check_branch
        %150 = sbr.rel (%p147) target = $region12
      $region11: #{tpu_custom_call.1} parent=5 // pred_region
        %s151 = ssub.s32 %s27, 1
        // Predicated region
        $region13: #{tpu_custom_call.1} parent=11 // pred_check
          %p152 = pneg %p88
        $region14: #{tpu_custom_call.1} parent=11 // pred_check_branch
          %154 = sbr.rel (%p152) target = $region16
        $region15: #{tpu_custom_call.1} parent=11 // pred_region
          _
        $region16: #{tpu_custom_call.1} parent=11 // pred_fallthru
          _
        // Predicated region
        $region17: #{tpu_custom_call.1} parent=11 // pred_check
          %p155 = pneg %p109
        $region18: #{tpu_custom_call.1} parent=11 // pred_check_branch
          %157 = sbr.rel (%p155) target = $region20
        $region19: #{tpu_custom_call.1} parent=11 // pred_region
          _
        $region20: #{tpu_custom_call.1} parent=11 // pred_fallthru
          _
      $region12: #{tpu_custom_call.1} parent=5 // pred_fallthru
        _
      %p158 = scmp.lt.s32.totalorder %s27, 6
      // Predicated region
      $region21: #{tpu_custom_call.1} parent=5 // pred_check
        %p159 = pneg %p158
      $region22: #{tpu_custom_call.1} parent=5 // pred_check_branch
        %161 = sbr.rel (%p159) target = $region24
      $region23: #{tpu_custom_call.1} parent=5 // pred_region
        // Predicated region
        $region25: #{tpu_custom_call.1} parent=23 // pred_check
          %p162 = pneg %p61
        $region26: #{tpu_custom_call.1} parent=23 // pred_check_branch
          %164 = sbr.rel (%p162) target = $region28
        $region27: #{tpu_custom_call.1} parent=23 // pred_region
          #allocation10 [shape = 'u32[6]{0}', space=smem, size = 0x18, scoped, tag = 'DMA stride descriptor']
          %s165 = sand.u32 %s51, 1
          %s166 = scalar_lea.sflag [#allocation6], %s165
          %s167 = sand.u32 %s51, 1
          %s168 = smul.addr %s167, 64
          %s169 = scalar_lea.vmem [#allocation5], %s168
          %s170 = smul.u32 4, %s34
          %s172 = ssub.s32 1024, 1024
          %173 = vsyncadd %s166, %s172
          %s174 = smul.addr %s35, 2
          %s175 = smul.addr %s170, 6
          %s176 = sadd.s32 %s174, %s175
          %s177 = smul.addr %s176, 128
          %s178 = scalar_lea.hbm %s2, %s177
          %s180 = sshll.u32 1, 14
          %s181 = sxor.u32 4294967295, %s180
          %s183 = sld [smem:[#allocation0]]
          %s184 = sadd.s32 2, %s183
          %s186 = sshll.u32 7, 26
          %s187 = sxor.u32 4294967295, %s186
          %s188 = sand.u32 0, %s187
          %s189 = sshll.u32 %s184, 26
          %s190 = sor.u32 %s188, %s189
          %s191 = sshll.u32 %s169, 4
          %s192 = int_to_ptr.vmem [resolvable:$true] %s191
          %198 = sst [smem:[#allocation10]] 768
          %s199 = scalar_lea.smem [#allocation10], 1
          %200 = sst [smem:[%s199]] 256
          %s201 = scalar_lea.smem [#allocation10], 2
          %202 = sst [smem:[%s201]] 2
          %s203 = scalar_lea.smem [#allocation10], 3
          %204 = sst [smem:[%s203]] 128
          %s205 = scalar_lea.smem [#allocation10], 4
          %206 = sst [smem:[%s205]] 128
          %s207 = scalar_lea.smem [#allocation10], 5
          %208 = sst [smem:[%s207]] 8
          %210 = dma.general %s178, 1024, %s192, %s166, 131072, [#allocation10], %s190, 0
        $region28: #{tpu_custom_call.1} parent=23 // pred_fallthru
          _
      $region24: #{tpu_custom_call.1} parent=5 // pred_fallthru
        _
      %p211 = scmp.le.s32.totalorder 1, %s27
      %p212 = scmp.lt.s32.totalorder %s27, 7
      %p213 = pnand %p211, %p212
      %p214 = pneg %p213
      // Predicated region
      $region29: #{tpu_custom_call.1} parent=5 // pred_check
        _
      $region30: #{tpu_custom_call.1} parent=5 // pred_check_branch
        %216 = sbr.rel (%p213) target = $region32
      $region31: #{tpu_custom_call.1} parent=5 // pred_region
        %s217 = ssub.s32 %s27, 1
        %s218 = sand.u32 %s54, 1
        %s219 = scalar_lea.sflag [#allocation6], %s218
        %s220 = sand.u32 %s54, 1
        %s221 = smul.addr %s220, 64
        %s222 = scalar_lea.vmem [#allocation5], %s221
        // Predicated region
        $region33: #{tpu_custom_call.1} parent=31 // pred_check
          %p223 = pneg %p67
        $region34: #{tpu_custom_call.1} parent=31 // pred_check_branch
          %225 = sbr.rel (%p223) target = $region36
        $region35: #{tpu_custom_call.1} parent=31 // pred_region
          %226 = dma.done %s219, 1024
        $region36: #{tpu_custom_call.1} parent=31 // pred_fallthru
          _
        %s227 = sand.u32 %s54, 1
        %s228 = scalar_lea.sflag [#allocation6], %s227
        %s229 = sand.u32 %s54, 1
        %s230 = smul.addr %s229, 64
        %s231 = scalar_lea.vmem [#allocation5], %s230
        %p232 = pneg %p67
        %p233 = pneg %p64
        %p234 = pneg %p88
        %p235 = pneg %p85
        %p236 = pneg %p109
        %p237 = pneg %p106
        %p238 = pneg %p137
        %p239 = pneg %p134
        %s240 = sand.u32 %s124, 1
        %s241 = scalar_lea.sflag [#allocation7], %s240
        %s242 = sand.u32 %s124, 1
        %s243 = smul.addr %s242, 96
        %s244 = scalar_lea.vmem [#allocation8], %s243
        %s245 = smul.u32 4, %s36
        %s246 = sld [smem:[#allocation3 + %s37]]
        %s247 = sld [smem:[#allocation4 + %s37]]
        %v248 = vld [vmem:[%s3] sm:$0xff]
        %v249 = vld [vmem:[%s3 + $0x8] sm:$0xff]
        %v250 = vld [vmem:[%s3 + $0x10] sm:$0xff]
        %v251 = vld [vmem:[%s4] sm:$0xff]
        %v252 = vld [vmem:[%s4 + $0x8] sm:$0xff]
        %v253 = vld [vmem:[%s222] sm:$0xff]
        %v254 = vld [vmem:[%s222 + $0x8] sm:$0xff]
        %vm255 = vcmask 130048
        %v257 = vsel %vm255, %v253, 0
        %v260 = vsel %vm255, %v254, 0
        %262 = vmatprep.subr.mxu0 0.0
        %263 = vmatpush1.msra.mxu0 0.0
        %264 = vmatprep.subr.mxu0 0.0
        %265 = vmatpush1.msra.mxu0 0.0
        %266 = vmatprep.subr.mxu0 0.0
        %267 = vmatpush1.msra.mxu0 0.0
        %268 = vmatprep.subr.mxu0 0.0
        %269 = vmatpush1.msra.mxu0 0.0
        %270 = vmatprep.subr.mxu0 0.0
        %271 = vmatpush1.msra.mxu0 0.0
        %272 = vmatprep.subr.mxu0 0.0
        %273 = vmatpush1.msra.mxu0 0.0
        %274 = vmatprep.subr.mxu0 0.0
        %275 = vmatpush1.msra.mxu0 0.0
        %276 = vmatprep.subr.mxu0 0.0
        %277 = vmatpush1.msra.mxu0 0.0
        %278 = vmatprep.subr.mxu0 0.0
        %279 = vmatpush1.msra.mxu0 0.0
        %280 = vmatprep.subr.mxu0 0.0
        %281 = vmatpush1.msra.mxu0 0.0
        %282 = vmatprep.subr.mxu0 0.0
        %283 = vmatpush1.msra.mxu0 0.0
        %284 = vmatprep.subr.mxu0 0.0
        %285 = vmatpush1.msra.mxu0 0.0
        %286 = vmatprep.subr.mxu0 0.0
        %287 = vmatpush1.msra.mxu0 0.0
        %288 = vmatprep.subr.mxu0 0.0
        %289 = vmatpush1.msra.mxu0 0.0
        %290 = vmatprep.subr.mxu0 0.0
        %291 = vmatpush1.msra.mxu0 %v252
        %292 = vmatprep.subr.mxu0 0.0
        %293 = vmatpush1.msra.mxu0 %v251
        %294 = vmatprep.subr.mxu0 0.0
        %295 = vmatpush2.msra.mxu0 0.0
        %296 = vmatprep.subr.mxu0 0.0
        %297 = vmatpush2.msra.mxu0 0.0
        %298 = vmatprep.subr.mxu0 0.0
        %299 = vmatpush2.msra.mxu0 0.0
        %300 = vmatprep.subr.mxu0 0.0
        %301 = vmatpush2.msra.mxu0 0.0
        %302 = vmatprep.subr.mxu0 0.0
        %303 = vmatpush2.msra.mxu0 0.0
        %304 = vmatprep.subr.mxu0 0.0
        %305 = vmatpush2.msra.mxu0 0.0
        %306 = vmatprep.subr.mxu0 0.0
        %307 = vmatpush2.msra.mxu0 0.0
        %308 = vmatprep.subr.mxu0 0.0
        %309 = vmatpush2.msra.mxu0 0.0
        %310 = vmatprep.subr.mxu0 0.0
        %311 = vmatpush2.msra.mxu0 0.0
        %312 = vmatprep.subr.mxu0 0.0
        %313 = vmatpush2.msra.mxu0 0.0
        %314 = vmatprep.subr.mxu0 0.0
        %315 = vmatpush2.msra.mxu0 0.0
        %316 = vmatprep.subr.mxu0 0.0
        %317 = vmatpush2.msra.mxu0 0.0
        %318 = vmatprep.subr.mxu0 0.0
        %319 = vmatpush2.msra.mxu0 0.0
        %320 = vmatprep.subr.mxu0 0.0
        %321 = vmatpush2.msra.mxu0 0.0
        %322 = vmatprep.subr.mxu0 0.0
        %323 = vmatpush2.msra.mxu0 0.0
        %324 = vmatprep.subr.mxu0 0.0
        %325 = vmatpush2.msra.mxu0 0.0
        %326 = vmatprep.mubr.f32.mxu0 0.0
        %327 = vmatmul.mubr.f32.gmra.mxu0 %v257
        %v328 = vpop.f32.mrf.mxu0
        %v329 = vadd.f32 0.0, %v328
        %v330 = vpop.f32.mrf.mxu0
        %331 = vmatprep.mubr.f32.mxu0 0.0
        %332 = vmatmul.mubr.f32.gmra.mxu0 %v260
        %v333 = vpop.f32.mrf.mxu0
        %v334 = vadd.f32 0.0, %v333
        %v335 = vpop.f32.mrf.mxu0
        %336 = vdwg.mxu0
        %v338 = vsel %vm255, %v248, 0
        %v341 = vsel %vm255, %v249, 0
        %v344 = vsel %vm255, %v250, 0
        %346 = vmatprep.subr.mxu0 0.0
        %347 = vmatpush1.msra.mxu0 0.0
        %348 = vmatprep.subr.mxu0 0.0
        %349 = vmatpush1.msra.mxu0 0.0
        %350 = vmatprep.subr.mxu0 0.0
        %351 = vmatpush1.msra.mxu0 0.0
        %352 = vmatprep.subr.mxu0 0.0
        %353 = vmatpush1.msra.mxu0 0.0
        %354 = vmatprep.subr.mxu0 0.0
        %355 = vmatpush1.msra.mxu0 0.0
        %356 = vmatprep.subr.mxu0 0.0
        %357 = vmatpush1.msra.mxu0 0.0
        %358 = vmatprep.subr.mxu0 0.0
        %359 = vmatpush1.msra.mxu0 0.0
        %360 = vmatprep.subr.mxu0 0.0
        %361 = vmatpush1.msra.mxu0 0.0
        %362 = vmatprep.subr.mxu0 0.0
        %363 = vmatpush1.msra.mxu0 0.0
        %364 = vmatprep.subr.mxu0 0.0
        %365 = vmatpush1.msra.mxu0 0.0
        %366 = vmatprep.subr.mxu0 0.0
        %367 = vmatpush1.msra.mxu0 0.0
        %368 = vmatprep.subr.mxu0 0.0
        %369 = vmatpush1.msra.mxu0 0.0
        %370 = vmatprep.subr.mxu0 0.0
        %371 = vmatpush1.msra.mxu0 0.0
        %372 = vmatprep.subr.mxu0 0.0
        %373 = vmatpush1.msra.mxu0 0.0
        %374 = vmatprep.subr.mxu0 0.0
        %375 = vmatpush1.msra.mxu0 %v334
        %376 = vmatprep.subr.mxu0 0.0
        %377 = vmatpush1.msra.mxu0 %v329
        %378 = vmatprep.subr.mxu0 0.0
        %379 = vmatpush2.msra.mxu0 0.0
        %380 = vmatprep.subr.mxu0 0.0
        %381 = vmatpush2.msra.mxu0 0.0
        %382 = vmatprep.subr.mxu0 0.0
        %383 = vmatpush2.msra.mxu0 0.0
        %384 = vmatprep.subr.mxu0 0.0
        %385 = vmatpush2.msra.mxu0 0.0
        %386 = vmatprep.subr.mxu0 0.0
        %387 = vmatpush2.msra.mxu0 0.0
        %388 = vmatprep.subr.mxu0 0.0
        %389 = vmatpush2.msra.mxu0 0.0
        %390 = vmatprep.subr.mxu0 0.0
        %391 = vmatpush2.msra.mxu0 0.0
        %392 = vmatprep.subr.mxu0 0.0
        %393 = vmatpush2.msra.mxu0 0.0
        %394 = vmatprep.subr.mxu0 0.0
        %395 = vmatpush2.msra.mxu0 0.0
        %396 = vmatprep.subr.mxu0 0.0
        %397 = vmatpush2.msra.mxu0 0.0
        %398 = vmatprep.subr.mxu0 0.0
        %399 = vmatpush2.msra.mxu0 0.0
        %400 = vmatprep.subr.mxu0 0.0
        %401 = vmatpush2.msra.mxu0 0.0
        %402 = vmatprep.subr.mxu0 0.0
        %403 = vmatpush2.msra.mxu0 0.0
        %404 = vmatprep.subr.mxu0 0.0
        %405 = vmatpush2.msra.mxu0 0.0
        %406 = vmatprep.subr.mxu0 0.0
        %407 = vmatpush2.msra.mxu0 0.0
        %408 = vmatprep.subr.mxu0 0.0
        %409 = vmatpush2.msra.mxu0 0.0
        %410 = vmatprep.mubr.f32.mxu0 0.0
        %411 = vmatmul.mubr.f32.gmra.mxu0 %v338
        %v412 = vpop.f32.mrf.mxu0
        %v413 = vadd.f32 0.0, %v412
        %v414 = vpop.f32.mrf.mxu0
        %415 = vmatprep.mubr.f32.mxu0 0.0
        %416 = vmatmul.mubr.f32.gmra.mxu0 %v341
        %v417 = vpop.f32.mrf.mxu0
        %v418 = vadd.f32 0.0, %v417
        %v419 = vpop.f32.mrf.mxu0
        %420 = vmatprep.mubr.f32.mxu0 0.0
        %421 = vmatmul.mubr.f32.gmra.mxu0 %v344
        %v422 = vpop.f32.mrf.mxu0
        %v423 = vadd.f32 0.0, %v422
        %v424 = vpop.f32.mrf.mxu0
        %425 = vdwg.mxu0
        %v426 = vstv %s246
        %v427 = vmul.f32 %v413, %v426
        %v428 = vmul.f32 %v418, %v426
        %v429 = vmul.f32 %v423, %v426
        %v430 = vstv %s247
        %v431 = vadd.f32 %v427, %v430
        %v432 = vadd.f32 %v428, %v430
        %v433 = vadd.f32 %v429, %v430
        %vm434 = vcmask 195584
        %435 = vst.msk [vmem:[%s244] sm:$0xff] %vm434, %v431
        %436 = vst.msk [vmem:[%s244 + $0x8] sm:$0xff] %vm434, %v432
        %437 = vst.msk [vmem:[%s244 + $0x10] sm:$0xff] %vm434, %v433
        %s438 = scalar_lea.vmem %s222, 16 [#allocation5]
        %v439 = vld [vmem:[%s438] sm:$0xff]
        %v440 = vld [vmem:[%s438 + $0x8] sm:$0xff]
        %v442 = vsel %vm255, %v439, 0
        %v445 = vsel %vm255, %v440, 0
        %447 = vmatprep.subr.mxu0 0.0
        %448 = vmatpush1.msra.mxu0 0.0
        %449 = vmatprep.subr.mxu0 0.0
        %450 = vmatpush1.msra.mxu0 0.0
        %451 = vmatprep.subr.mxu0 0.0
        %452 = vmatpush1.msra.mxu0 0.0
        %453 = vmatprep.subr.mxu0 0.0
        %454 = vmatpush1.msra.mxu0 0.0
        %455 = vmatprep.subr.mxu0 0.0
        %456 = vmatpush1.msra.mxu0 0.0
        %457 = vmatprep.subr.mxu0 0.0
        %458 = vmatpush1.msra.mxu0 0.0
        %459 = vmatprep.subr.mxu0 0.0
        %460 = vmatpush1.msra.mxu0 0.0
        %461 = vmatprep.subr.mxu0 0.0
        %462 = vmatpush1.msra.mxu0 0.0
        %463 = vmatprep.subr.mxu0 0.0
        %464 = vmatpush1.msra.mxu0 0.0
        %465 = vmatprep.subr.mxu0 0.0
        %466 = vmatpush1.msra.mxu0 0.0
        %467 = vmatprep.subr.mxu0 0.0
        %468 = vmatpush1.msra.mxu0 0.0
        %469 = vmatprep.subr.mxu0 0.0
        %470 = vmatpush1.msra.mxu0 0.0
        %471 = vmatprep.subr.mxu0 0.0
        %472 = vmatpush1.msra.mxu0 0.0
        %473 = vmatprep.subr.mxu0 0.0
        %474 = vmatpush1.msra.mxu0 0.0
        %475 = vmatprep.subr.mxu0 0.0
        %476 = vmatpush1.msra.mxu0 %v252
        %477 = vmatprep.subr.mxu0 0.0
        %478 = vmatpush1.msra.mxu0 %v251
        %479 = vmatprep.subr.mxu0 0.0
        %480 = vmatpush2.msra.mxu0 0.0
        %481 = vmatprep.subr.mxu0 0.0
        %482 = vmatpush2.msra.mxu0 0.0
        %483 = vmatprep.subr.mxu0 0.0
        %484 = vmatpush2.msra.mxu0 0.0
        %485 = vmatprep.subr.mxu0 0.0
        %486 = vmatpush2.msra.mxu0 0.0
        %487 = vmatprep.subr.mxu0 0.0
        %488 = vmatpush2.msra.mxu0 0.0
        %489 = vmatprep.subr.mxu0 0.0
        %490 = vmatpush2.msra.mxu0 0.0
        %491 = vmatprep.subr.mxu0 0.0
        %492 = vmatpush2.msra.mxu0 0.0
        %493 = vmatprep.subr.mxu0 0.0
        %494 = vmatpush2.msra.mxu0 0.0
        %495 = vmatprep.subr.mxu0 0.0
        %496 = vmatpush2.msra.mxu0 0.0
        %497 = vmatprep.subr.mxu0 0.0
        %498 = vmatpush2.msra.mxu0 0.0
        %499 = vmatprep.subr.mxu0 0.0
        %500 = vmatpush2.msra.mxu0 0.0
        %501 = vmatprep.subr.mxu0 0.0
        %502 = vmatpush2.msra.mxu0 0.0
        %503 = vmatprep.subr.mxu0 0.0
        %504 = vmatpush2.msra.mxu0 0.0
        %505 = vmatprep.subr.mxu0 0.0
        %506 = vmatpush2.msra.mxu0 0.0
        %507 = vmatprep.subr.mxu0 0.0
        %508 = vmatpush2.msra.mxu0 0.0
        %509 = vmatprep.subr.mxu0 0.0
        %510 = vmatpush2.msra.mxu0 0.0
        %511 = vmatprep.mubr.f32.mxu0 0.0
        %512 = vmatmul.mubr.f32.gmra.mxu0 %v442
        %v513 = vpop.f32.mrf.mxu0
        %v514 = vadd.f32 0.0, %v513
        %v515 = vpop.f32.mrf.mxu0
        %516 = vmatprep.mubr.f32.mxu0 0.0
        %517 = vmatmul.mubr.f32.gmra.mxu0 %v445
        %v518 = vpop.f32.mrf.mxu0
        %v519 = vadd.f32 0.0, %v518
        %v520 = vpop.f32.mrf.mxu0
        %521 = vdwg.mxu0
        %522 = vmatprep.subr.mxu0 0.0
        %523 = vmatpush1.msra.mxu0 0.0
        %524 = vmatprep.subr.mxu0 0.0
        %525 = vmatpush1.msra.mxu0 0.0
        %526 = vmatprep.subr.mxu0 0.0
        %527 = vmatpush1.msra.mxu0 0.0
        %528 = vmatprep.subr.mxu0 0.0
        %529 = vmatpush1.msra.mxu0 0.0
        %530 = vmatprep.subr.mxu0 0.0
        %531 = vmatpush1.msra.mxu0 0.0
        %532 = vmatprep.subr.mxu0 0.0
        %533 = vmatpush1.msra.mxu0 0.0
        %534 = vmatprep.subr.mxu0 0.0
        %535 = vmatpush1.msra.mxu0 0.0
        %536 = vmatprep.subr.mxu0 0.0
        %537 = vmatpush1.msra.mxu0 0.0
        %538 = vmatprep.subr.mxu0 0.0
        %539 = vmatpush1.msra.mxu0 0.0
        %540 = vmatprep.subr.mxu0 0.0
        %541 = vmatpush1.msra.mxu0 0.0
        %542 = vmatprep.subr.mxu0 0.0
        %543 = vmatpush1.msra.mxu0 0.0
        %544 = vmatprep.subr.mxu0 0.0
        %545 = vmatpush1.msra.mxu0 0.0
        %546 = vmatprep.subr.mxu0 0.0
        %547 = vmatpush1.msra.mxu0 0.0
        %548 = vmatprep.subr.mxu0 0.0
        %549 = vmatpush1.msra.mxu0 0.0
        %550 = vmatprep.subr.mxu0 0.0
        %551 = vmatpush1.msra.mxu0 %v519
        %552 = vmatprep.subr.mxu0 0.0
        %553 = vmatpush1.msra.mxu0 %v514
        %554 = vmatprep.subr.mxu0 0.0
        %555 = vmatpush2.msra.mxu0 0.0
        %556 = vmatprep.subr.mxu0 0.0
        %557 = vmatpush2.msra.mxu0 0.0
        %558 = vmatprep.subr.mxu0 0.0
        %559 = vmatpush2.msra.mxu0 0.0
        %560 = vmatprep.subr.mxu0 0.0
        %561 = vmatpush2.msra.mxu0 0.0
        %562 = vmatprep.subr.mxu0 0.0
        %563 = vmatpush2.msra.mxu0 0.0
        %564 = vmatprep.subr.mxu0 0.0
        %565 = vmatpush2.msra.mxu0 0.0
        %566 = vmatprep.subr.mxu0 0.0
        %567 = vmatpush2.msra.mxu0 0.0
        %568 = vmatprep.subr.mxu0 0.0
        %569 = vmatpush2.msra.mxu0 0.0
        %570 = vmatprep.subr.mxu0 0.0
        %571 = vmatpush2.msra.mxu0 0.0
        %572 = vmatprep.subr.mxu0 0.0
        %573 = vmatpush2.msra.mxu0 0.0
        %574 = vmatprep.subr.mxu0 0.0
        %575 = vmatpush2.msra.mxu0 0.0
        %576 = vmatprep.subr.mxu0 0.0
        %577 = vmatpush2.msra.mxu0 0.0
        %578 = vmatprep.subr.mxu0 0.0
        %579 = vmatpush2.msra.mxu0 0.0
        %580 = vmatprep.subr.mxu0 0.0
        %581 = vmatpush2.msra.mxu0 0.0
        %582 = vmatprep.subr.mxu0 0.0
        %583 = vmatpush2.msra.mxu0 0.0
        %584 = vmatprep.subr.mxu0 0.0
        %585 = vmatpush2.msra.mxu0 0.0
        %586 = vmatprep.mubr.f32.mxu0 0.0
        %587 = vmatmul.mubr.f32.gmra.mxu0 %v338
        %v588 = vpop.f32.mrf.mxu0
        %v589 = vadd.f32 0.0, %v588
        %v590 = vpop.f32.mrf.mxu0
        %591 = vmatprep.mubr.f32.mxu0 0.0
        %592 = vmatmul.mubr.f32.gmra.mxu0 %v341
        %v593 = vpop.f32.mrf.mxu0
        %v594 = vadd.f32 0.0, %v593
        %v595 = vpop.f32.mrf.mxu0
        %596 = vmatprep.mubr.f32.mxu0 0.0
        %597 = vmatmul.mubr.f32.gmra.mxu0 %v344
        %v598 = vpop.f32.mrf.mxu0
        %v599 = vadd.f32 0.0, %v598
        %v600 = vpop.f32.mrf.mxu0
        %601 = vdwg.mxu0
        %v602 = vmul.f32 %v589, %v426
        %v603 = vmul.f32 %v594, %v426
        %v604 = vmul.f32 %v599, %v426
        %v605 = vadd.f32 %v602, %v430
        %v606 = vadd.f32 %v603, %v430
        %v607 = vadd.f32 %v604, %v430
        %s608 = scalar_lea.vmem %s244, 24 [#allocation8]
        %609 = vst.msk [vmem:[%s608] sm:$0xff] %vm434, %v605
        %610 = vst.msk [vmem:[%s608 + $0x8] sm:$0xff] %vm434, %v606
        %611 = vst.msk [vmem:[%s608 + $0x10] sm:$0xff] %vm434, %v607
        %s612 = scalar_lea.vmem %s222, 32 [#allocation5]
        %v613 = vld [vmem:[%s612] sm:$0xff]
        %v614 = vld [vmem:[%s612 + $0x8] sm:$0xff]
        %v616 = vsel %vm255, %v613, 0
        %v619 = vsel %vm255, %v614, 0
        %621 = vmatprep.subr.mxu0 0.0
        %622 = vmatpush1.msra.mxu0 0.0
        %623 = vmatprep.subr.mxu0 0.0
        %624 = vmatpush1.msra.mxu0 0.0
        %625 = vmatprep.subr.mxu0 0.0
        %626 = vmatpush1.msra.mxu0 0.0
        %627 = vmatprep.subr.mxu0 0.0
        %628 = vmatpush1.msra.mxu0 0.0
        %629 = vmatprep.subr.mxu0 0.0
        %630 = vmatpush1.msra.mxu0 0.0
        %631 = vmatprep.subr.mxu0 0.0
        %632 = vmatpush1.msra.mxu0 0.0
        %633 = vmatprep.subr.mxu0 0.0
        %634 = vmatpush1.msra.mxu0 0.0
        %635 = vmatprep.subr.mxu0 0.0
        %636 = vmatpush1.msra.mxu0 0.0
        %637 = vmatprep.subr.mxu0 0.0
        %638 = vmatpush1.msra.mxu0 0.0
        %639 = vmatprep.subr.mxu0 0.0
        %640 = vmatpush1.msra.mxu0 0.0
        %641 = vmatprep.subr.mxu0 0.0
        %642 = vmatpush1.msra.mxu0 0.0
        %643 = vmatprep.subr.mxu0 0.0
        %644 = vmatpush1.msra.mxu0 0.0
        %645 = vmatprep.subr.mxu0 0.0
        %646 = vmatpush1.msra.mxu0 0.0
        %647 = vmatprep.subr.mxu0 0.0
        %648 = vmatpush1.msra.mxu0 0.0
        %649 = vmatprep.subr.mxu0 0.0
        %650 = vmatpush1.msra.mxu0 %v252
        %651 = vmatprep.subr.mxu0 0.0
        %652 = vmatpush1.msra.mxu0 %v251
        %653 = vmatprep.subr.mxu0 0.0
        %654 = vmatpush2.msra.mxu0 0.0
        %655 = vmatprep.subr.mxu0 0.0
        %656 = vmatpush2.msra.mxu0 0.0
        %657 = vmatprep.subr.mxu0 0.0
        %658 = vmatpush2.msra.mxu0 0.0
        %659 = vmatprep.subr.mxu0 0.0
        %660 = vmatpush2.msra.mxu0 0.0
        %661 = vmatprep.subr.mxu0 0.0
        %662 = vmatpush2.msra.mxu0 0.0
        %663 = vmatprep.subr.mxu0 0.0
        %664 = vmatpush2.msra.mxu0 0.0
        %665 = vmatprep.subr.mxu0 0.0
        %666 = vmatpush2.msra.mxu0 0.0
        %667 = vmatprep.subr.mxu0 0.0
        %668 = vmatpush2.msra.mxu0 0.0
        %669 = vmatprep.subr.mxu0 0.0
        %670 = vmatpush2.msra.mxu0 0.0
        %671 = vmatprep.subr.mxu0 0.0
        %672 = vmatpush2.msra.mxu0 0.0
        %673 = vmatprep.subr.mxu0 0.0
        %674 = vmatpush2.msra.mxu0 0.0
        %675 = vmatprep.subr.mxu0 0.0
        %676 = vmatpush2.msra.mxu0 0.0
        %677 = vmatprep.subr.mxu0 0.0
        %678 = vmatpush2.msra.mxu0 0.0
        %679 = vmatprep.subr.mxu0 0.0
        %680 = vmatpush2.msra.mxu0 0.0
        %681 = vmatprep.subr.mxu0 0.0
        %682 = vmatpush2.msra.mxu0 0.0
        %683 = vmatprep.subr.mxu0 0.0
        %684 = vmatpush2.msra.mxu0 0.0
        %685 = vmatprep.mubr.f32.mxu0 0.0
        %686 = vmatmul.mubr.f32.gmra.mxu0 %v616
        %v687 = vpop.f32.mrf.mxu0
        %v688 = vadd.f32 0.0, %v687
        %v689 = vpop.f32.mrf.mxu0
        %690 = vmatprep.mubr.f32.mxu0 0.0
        %691 = vmatmul.mubr.f32.gmra.mxu0 %v619
        %v692 = vpop.f32.mrf.mxu0
        %v693 = vadd.f32 0.0, %v692
        %v694 = vpop.f32.mrf.mxu0
        %695 = vdwg.mxu0
        %696 = vmatprep.subr.mxu0 0.0
        %697 = vmatpush1.msra.mxu0 0.0
        %698 = vmatprep.subr.mxu0 0.0
        %699 = vmatpush1.msra.mxu0 0.0
        %700 = vmatprep.subr.mxu0 0.0
        %701 = vmatpush1.msra.mxu0 0.0
        %702 = vmatprep.subr.mxu0 0.0
        %703 = vmatpush1.msra.mxu0 0.0
        %704 = vmatprep.subr.mxu0 0.0
        %705 = vmatpush1.msra.mxu0 0.0
        %706 = vmatprep.subr.mxu0 0.0
        %707 = vmatpush1.msra.mxu0 0.0
        %708 = vmatprep.subr.mxu0 0.0
        %709 = vmatpush1.msra.mxu0 0.0
        %710 = vmatprep.subr.mxu0 0.0
        %711 = vmatpush1.msra.mxu0 0.0
        %712 = vmatprep.subr.mxu0 0.0
        %713 = vmatpush1.msra.mxu0 0.0
        %714 = vmatprep.subr.mxu0 0.0
        %715 = vmatpush1.msra.mxu0 0.0
        %716 = vmatprep.subr.mxu0 0.0
        %717 = vmatpush1.msra.mxu0 0.0
        %718 = vmatprep.subr.mxu0 0.0
        %719 = vmatpush1.msra.mxu0 0.0
        %720 = vmatprep.subr.mxu0 0.0
        %721 = vmatpush1.msra.mxu0 0.0
        %722 = vmatprep.subr.mxu0 0.0
        %723 = vmatpush1.msra.mxu0 0.0
        %724 = vmatprep.subr.mxu0 0.0
        %725 = vmatpush1.msra.mxu0 %v693
        %726 = vmatprep.subr.mxu0 0.0
        %727 = vmatpush1.msra.mxu0 %v688
        %728 = vmatprep.subr.mxu0 0.0
        %729 = vmatpush2.msra.mxu0 0.0
        %730 = vmatprep.subr.mxu0 0.0
        %731 = vmatpush2.msra.mxu0 0.0
        %732 = vmatprep.subr.mxu0 0.0
        %733 = vmatpush2.msra.mxu0 0.0
        %734 = vmatprep.subr.mxu0 0.0
        %735 = vmatpush2.msra.mxu0 0.0
        %736 = vmatprep.subr.mxu0 0.0
        %737 = vmatpush2.msra.mxu0 0.0
        %738 = vmatprep.subr.mxu0 0.0
        %739 = vmatpush2.msra.mxu0 0.0
        %740 = vmatprep.subr.mxu0 0.0
        %741 = vmatpush2.msra.mxu0 0.0
        %742 = vmatprep.subr.mxu0 0.0
        %743 = vmatpush2.msra.mxu0 0.0
        %744 = vmatprep.subr.mxu0 0.0
        %745 = vmatpush2.msra.mxu0 0.0
        %746 = vmatprep.subr.mxu0 0.0
        %747 = vmatpush2.msra.mxu0 0.0
        %748 = vmatprep.subr.mxu0 0.0
        %749 = vmatpush2.msra.mxu0 0.0
        %750 = vmatprep.subr.mxu0 0.0
        %751 = vmatpush2.msra.mxu0 0.0
        %752 = vmatprep.subr.mxu0 0.0
        %753 = vmatpush2.msra.mxu0 0.0
        %754 = vmatprep.subr.mxu0 0.0
        %755 = vmatpush2.msra.mxu0 0.0
        %756 = vmatprep.subr.mxu0 0.0
        %757 = vmatpush2.msra.mxu0 0.0
        %758 = vmatprep.subr.mxu0 0.0
        %759 = vmatpush2.msra.mxu0 0.0
        %760 = vmatprep.mubr.f32.mxu0 0.0
        %761 = vmatmul.mubr.f32.gmra.mxu0 %v338
        %v762 = vpop.f32.mrf.mxu0
        %v763 = vadd.f32 0.0, %v762
        %v764 = vpop.f32.mrf.mxu0
        %765 = vmatprep.mubr.f32.mxu0 0.0
        %766 = vmatmul.mubr.f32.gmra.mxu0 %v341
        %v767 = vpop.f32.mrf.mxu0
        %v768 = vadd.f32 0.0, %v767
        %v769 = vpop.f32.mrf.mxu0
        %770 = vmatprep.mubr.f32.mxu0 0.0
        %771 = vmatmul.mubr.f32.gmra.mxu0 %v344
        %v772 = vpop.f32.mrf.mxu0
        %v773 = vadd.f32 0.0, %v772
        %v774 = vpop.f32.mrf.mxu0
        %775 = vdwg.mxu0
        %v776 = vmul.f32 %v763, %v426
        %v777 = vmul.f32 %v768, %v426
        %v778 = vmul.f32 %v773, %v426
        %v779 = vadd.f32 %v776, %v430
        %v780 = vadd.f32 %v777, %v430
        %v781 = vadd.f32 %v778, %v430
        %s782 = scalar_lea.vmem %s244, 48 [#allocation8]
        %783 = vst.msk [vmem:[%s782] sm:$0xff] %vm434, %v779
        %784 = vst.msk [vmem:[%s782 + $0x8] sm:$0xff] %vm434, %v780
        %785 = vst.msk [vmem:[%s782 + $0x10] sm:$0xff] %vm434, %v781
        %s786 = scalar_lea.vmem %s222, 48 [#allocation5]
        %v787 = vld [vmem:[%s786] sm:$0xff]
        %v788 = vld [vmem:[%s786 + $0x8] sm:$0xff]
        %v790 = vsel %vm255, %v787, 0
        %v793 = vsel %vm255, %v788, 0
        %795 = vmatprep.subr.mxu0 0.0
        %796 = vmatpush1.msra.mxu0 0.0
        %797 = vmatprep.subr.mxu0 0.0
        %798 = vmatpush1.msra.mxu0 0.0
        %799 = vmatprep.subr.mxu0 0.0
        %800 = vmatpush1.msra.mxu0 0.0
        %801 = vmatprep.subr.mxu0 0.0
        %802 = vmatpush1.msra.mxu0 0.0
        %803 = vmatprep.subr.mxu0 0.0
        %804 = vmatpush1.msra.mxu0 0.0
        %805 = vmatprep.subr.mxu0 0.0
        %806 = vmatpush1.msra.mxu0 0.0
        %807 = vmatprep.subr.mxu0 0.0
        %808 = vmatpush1.msra.mxu0 0.0
        %809 = vmatprep.subr.mxu0 0.0
        %810 = vmatpush1.msra.mxu0 0.0
        %811 = vmatprep.subr.mxu0 0.0
        %812 = vmatpush1.msra.mxu0 0.0
        %813 = vmatprep.subr.mxu0 0.0
        %814 = vmatpush1.msra.mxu0 0.0
        %815 = vmatprep.subr.mxu0 0.0
        %816 = vmatpush1.msra.mxu0 0.0
        %817 = vmatprep.subr.mxu0 0.0
        %818 = vmatpush1.msra.mxu0 0.0
        %819 = vmatprep.subr.mxu0 0.0
        %820 = vmatpush1.msra.mxu0 0.0
        %821 = vmatprep.subr.mxu0 0.0
        %822 = vmatpush1.msra.mxu0 0.0
        %823 = vmatprep.subr.mxu0 0.0
        %824 = vmatpush1.msra.mxu0 %v252
        %825 = vmatprep.subr.mxu0 0.0
        %826 = vmatpush1.msra.mxu0 %v251
        %827 = vmatprep.subr.mxu0 0.0
        %828 = vmatpush2.msra.mxu0 0.0
        %829 = vmatprep.subr.mxu0 0.0
        %830 = vmatpush2.msra.mxu0 0.0
        %831 = vmatprep.subr.mxu0 0.0
        %832 = vmatpush2.msra.mxu0 0.0
        %833 = vmatprep.subr.mxu0 0.0
        %834 = vmatpush2.msra.mxu0 0.0
        %835 = vmatprep.subr.mxu0 0.0
        %836 = vmatpush2.msra.mxu0 0.0
        %837 = vmatprep.subr.mxu0 0.0
        %838 = vmatpush2.msra.mxu0 0.0
        %839 = vmatprep.subr.mxu0 0.0
        %840 = vmatpush2.msra.mxu0 0.0
        %841 = vmatprep.subr.mxu0 0.0
        %842 = vmatpush2.msra.mxu0 0.0
        %843 = vmatprep.subr.mxu0 0.0
        %844 = vmatpush2.msra.mxu0 0.0
        %845 = vmatprep.subr.mxu0 0.0
        %846 = vmatpush2.msra.mxu0 0.0
        %847 = vmatprep.subr.mxu0 0.0
        %848 = vmatpush2.msra.mxu0 0.0
        %849 = vmatprep.subr.mxu0 0.0
        %850 = vmatpush2.msra.mxu0 0.0
        %851 = vmatprep.subr.mxu0 0.0
        %852 = vmatpush2.msra.mxu0 0.0
        %853 = vmatprep.subr.mxu0 0.0
        %854 = vmatpush2.msra.mxu0 0.0
        %855 = vmatprep.subr.mxu0 0.0
        %856 = vmatpush2.msra.mxu0 0.0
        %857 = vmatprep.subr.mxu0 0.0
        %858 = vmatpush2.msra.mxu0 0.0
        %859 = vmatprep.mubr.f32.mxu0 0.0
        %860 = vmatmul.mubr.f32.gmra.mxu0 %v790
        %v861 = vpop.f32.mrf.mxu0
        %v862 = vadd.f32 0.0, %v861
        %v863 = vpop.f32.mrf.mxu0
        %864 = vmatprep.mubr.f32.mxu0 0.0
        %865 = vmatmul.mubr.f32.gmra.mxu0 %v793
        %v866 = vpop.f32.mrf.mxu0
        %v867 = vadd.f32 0.0, %v866
        %v868 = vpop.f32.mrf.mxu0
        %869 = vdwg.mxu0
        %870 = vmatprep.subr.mxu0 0.0
        %871 = vmatpush1.msra.mxu0 0.0
        %872 = vmatprep.subr.mxu0 0.0
        %873 = vmatpush1.msra.mxu0 0.0
        %874 = vmatprep.subr.mxu0 0.0
        %875 = vmatpush1.msra.mxu0 0.0
        %876 = vmatprep.subr.mxu0 0.0
        %877 = vmatpush1.msra.mxu0 0.0
        %878 = vmatprep.subr.mxu0 0.0
        %879 = vmatpush1.msra.mxu0 0.0
        %880 = vmatprep.subr.mxu0 0.0
        %881 = vmatpush1.msra.mxu0 0.0
        %882 = vmatprep.subr.mxu0 0.0
        %883 = vmatpush1.msra.mxu0 0.0
        %884 = vmatprep.subr.mxu0 0.0
        %885 = vmatpush1.msra.mxu0 0.0
        %886 = vmatprep.subr.mxu0 0.0
        %887 = vmatpush1.msra.mxu0 0.0
        %888 = vmatprep.subr.mxu0 0.0
        %889 = vmatpush1.msra.mxu0 0.0
        %890 = vmatprep.subr.mxu0 0.0
        %891 = vmatpush1.msra.mxu0 0.0
        %892 = vmatprep.subr.mxu0 0.0
        %893 = vmatpush1.msra.mxu0 0.0
        %894 = vmatprep.subr.mxu0 0.0
        %895 = vmatpush1.msra.mxu0 0.0
        %896 = vmatprep.subr.mxu0 0.0
        %897 = vmatpush1.msra.mxu0 0.0
        %898 = vmatprep.subr.mxu0 0.0
        %899 = vmatpush1.msra.mxu0 %v867
        %900 = vmatprep.subr.mxu0 0.0
        %901 = vmatpush1.msra.mxu0 %v862
        %902 = vmatprep.subr.mxu0 0.0
        %903 = vmatpush2.msra.mxu0 0.0
        %904 = vmatprep.subr.mxu0 0.0
        %905 = vmatpush2.msra.mxu0 0.0
        %906 = vmatprep.subr.mxu0 0.0
        %907 = vmatpush2.msra.mxu0 0.0
        %908 = vmatprep.subr.mxu0 0.0
        %909 = vmatpush2.msra.mxu0 0.0
        %910 = vmatprep.subr.mxu0 0.0
        %911 = vmatpush2.msra.mxu0 0.0
        %912 = vmatprep.subr.mxu0 0.0
        %913 = vmatpush2.msra.mxu0 0.0
        %914 = vmatprep.subr.mxu0 0.0
        %915 = vmatpush2.msra.mxu0 0.0
        %916 = vmatprep.subr.mxu0 0.0
        %917 = vmatpush2.msra.mxu0 0.0
        %918 = vmatprep.subr.mxu0 0.0
        %919 = vmatpush2.msra.mxu0 0.0
        %920 = vmatprep.subr.mxu0 0.0
        %921 = vmatpush2.msra.mxu0 0.0
        %922 = vmatprep.subr.mxu0 0.0
        %923 = vmatpush2.msra.mxu0 0.0
        %924 = vmatprep.subr.mxu0 0.0
        %925 = vmatpush2.msra.mxu0 0.0
        %926 = vmatprep.subr.mxu0 0.0
        %927 = vmatpush2.msra.mxu0 0.0
        %928 = vmatprep.subr.mxu0 0.0
        %929 = vmatpush2.msra.mxu0 0.0
        %930 = vmatprep.subr.mxu0 0.0
        %931 = vmatpush2.msra.mxu0 0.0
        %932 = vmatprep.subr.mxu0 0.0
        %933 = vmatpush2.msra.mxu0 0.0
        %934 = vmatprep.mubr.f32.mxu0 0.0
        %935 = vmatmul.mubr.f32.gmra.mxu0 %v338
        %v936 = vpop.f32.mrf.mxu0
        %v937 = vadd.f32 0.0, %v936
        %v938 = vpop.f32.mrf.mxu0
        %939 = vmatprep.mubr.f32.mxu0 0.0
        %940 = vmatmul.mubr.f32.gmra.mxu0 %v341
        %v941 = vpop.f32.mrf.mxu0
        %v942 = vadd.f32 0.0, %v941
        %v943 = vpop.f32.mrf.mxu0
        %944 = vmatprep.mubr.f32.mxu0 0.0
        %945 = vmatmul.mubr.f32.gmra.mxu0 %v344
        %v946 = vpop.f32.mrf.mxu0
        %v947 = vadd.f32 0.0, %v946
        %v948 = vpop.f32.mrf.mxu0
        %949 = vdwg.mxu0
        %v950 = vmul.f32 %v937, %v426
        %v951 = vmul.f32 %v942, %v426
        %v952 = vmul.f32 %v947, %v426
        %v953 = vadd.f32 %v950, %v430
        %v954 = vadd.f32 %v951, %v430
        %v955 = vadd.f32 %v952, %v430
        %s956 = scalar_lea.vmem %s244, 72 [#allocation8]
        %957 = vst.msk [vmem:[%s956] sm:$0xff] %vm434, %v953
        %958 = vst.msk [vmem:[%s956 + $0x8] sm:$0xff] %vm434, %v954
        %959 = vst.msk [vmem:[%s956 + $0x10] sm:$0xff] %vm434, %v955
        %s960 = sand.u32 %s124, 1
        %s961 = scalar_lea.sflag [#allocation7], %s960
        %s962 = sand.u32 %s124, 1
        %s963 = smul.addr %s962, 96
        %s964 = scalar_lea.vmem [#allocation8], %s963
        // Predicated region
        $region37: #{tpu_custom_call.1} parent=31 // pred_check
          %p965 = pneg %p134
        $region38: #{tpu_custom_call.1} parent=31 // pred_check_branch
          %967 = sbr.rel (%p965) target = $region40
        $region39: #{tpu_custom_call.1} parent=31 // pred_region
          %s969 = ssub.s32 1536, 1536
          %970 = vsyncadd %s961, %s969
          %s971 = smul.addr %s37, 12
          %s972 = smul.addr %s36, 36
          %s973 = sadd.s32 %s971, %s972
          %s974 = smul.addr %s973, 128
          %s975 = scalar_lea.hbm %s5, %s974
          %s976 = sshll.u32 %s964, 4
          %s977 = int_to_ptr.vmem [resolvable:$true] %s976
          %982 = dma.vmem_to_hbm [thread:$0]  %s977, 1536, %s975, %s961, 128, 128, 8
        $region40: #{tpu_custom_call.1} parent=31 // pred_fallthru
          _
      $region32: #{tpu_custom_call.1} parent=5 // pred_fallthru
        _
      %p983 = scmp.le.s32.totalorder 2, %s27
      // Predicated region
      $region41: #{tpu_custom_call.1} parent=5 // pred_check
        %p984 = pneg %p983
      $region42: #{tpu_custom_call.1} parent=5 // pred_check_branch
        %986 = sbr.rel (%p984) target = $region44
      $region43: #{tpu_custom_call.1} parent=5 // pred_region
        %s987 = ssub.s32 %s27, 2
        // Predicated region
        $region45: #{tpu_custom_call.1} parent=43 // pred_check
          %p988 = pneg %p140
        $region46: #{tpu_custom_call.1} parent=43 // pred_check_branch
          %990 = sbr.rel (%p988) target = $region48
        $region47: #{tpu_custom_call.1} parent=43 // pred_region
          %s991 = sand.u32 %s125, 1
          %s992 = scalar_lea.sflag [#allocation7], %s991
          %s993 = sand.u32 %s125, 1
          %s994 = smul.addr %s993, 96
          %s995 = scalar_lea.vmem [#allocation8], %s994
          %996 = dma.done %s992, 1536
        $region48: #{tpu_custom_call.1} parent=43 // pred_fallthru
          _
      $region44: #{tpu_custom_call.1} parent=5 // pred_fallthru
        _
    $region6: #{tpu_custom_call.1} parent=1 // loop_footer
      %s31 = sadd.s32 1, %s27
    $region7: #{tpu_custom_call.1} parent=1 // loop_footer_branch
      %26 = sbr.rel target = $region3
    $region8: #{tpu_custom_call.1} parent=1 // loop_exit
      _
    %997 = vsyncpa [#allocation6], 1
    %s998 = scalar_lea.sflag [#allocation6], 1
    %999 = vsyncpa %s998, 1
    %1000 = vsyncpa [#allocation7], 1
    %s1001 = scalar_lea.sflag [#allocation7], 1
    %1002 = vsyncpa %s1001, 1

</llo_original>
